<compile_context>
chip_gen: v7x
topology: tpu7x:2x2x1
jax: 0.10.0
libtpu: 0.0.40
codegen_flags: <defaults>
</compile_context>

<pallas_src>
import jax
import jax.numpy as jnp
from jax import lax
from jax.experimental import pallas as pl
from jax.experimental.pallas import tpu as pltpu


def _rnn_adding_kernel(xw_ref, whh_ref, wf_ref, bf_ref, out_ref):
    """Single-invocation kernel.

    xw_ref : (S, B_pad, H_pad)  precomputed x @ W_ih^T + (b_ih + b_hh), time-major
    whh_ref: (H_pad, H_pad)     W_hh^T, zero-padded
    wf_ref : (H_pad, 128)       final-layer weight in column 0, rest zero
    bf_ref : (1, 128)           final-layer bias in column 0, rest zero
    out_ref: (B_pad, 128)       lane-dense output; column 0 carries the result
    """
    S = xw_ref.shape[0]
    whh = whh_ref[...]                                    # hoisted, read once

    h0 = jnp.zeros(xw_ref.shape[1:], jnp.float32)         # h0 = 0 (PyTorch default)

    def step(t, h):
        pre = xw_ref[t] + jnp.dot(h, whh, preferred_element_type=jnp.float32)
        return jnp.tanh(pre)

    # Short, fixed trip count -> fully unrolled so the scheduler sees across steps.
    h = lax.fori_loop(0, S, step, h0, unroll=True)

    y = (jnp.dot(h, wf_ref[...], preferred_element_type=jnp.float32)
         + bf_ref[...])                                   # (B_pad, 128), lane-dense
    out_ref[...] = y.astype(out_ref.dtype)


def adding_problem_rnn_forward(x, params):
    """x: (batch, seq, input_size) float32.  Returns (batch,) float32."""
    w_ih, w_hh, b_ih, b_hh, w_f, b_f = params
    B, S, I = x.shape
    H = w_hh.shape[0]

    # Padded sizes: batch -> multiple of 8 (sublane), hidden -> multiple of 128 (lane).
    B_pad = max(8, ((B + 7) // 8) * 8)
    H_pad = max(128, ((H + 127) // 128) * 128)
    OUT_LANES = 128                                        # lane-dense output width

    # --- Hoisted input projection (one big matmul, outside the serial loop) ---
    xw = jnp.einsum('bsi,ih->bsh', x, w_ih.T) + (b_ih + b_hh)     # (B, S, H)
    xw_tm = jnp.transpose(xw, (1, 0, 2))                          # (S, B, H)
    xw_pad = jnp.zeros((S, B_pad, H_pad), jnp.float32)
    xw_pad = xw_pad.at[:, :B, :H].set(xw_tm)

    # --- Zero-padded recurrent and output weights (pad lanes stay exactly 0) ---
    whh_pad = jnp.zeros((H_pad, H_pad), jnp.float32).at[:H, :H].set(w_hh.T)
    wf_pad = jnp.zeros((H_pad, OUT_LANES), jnp.float32).at[:H, 0].set(w_f.reshape(H))
    bf_pad = jnp.zeros((1, OUT_LANES), jnp.float32).at[0, 0].set(b_f.reshape(()))

    vmem_spec = pl.BlockSpec(memory_space=pltpu.MemorySpace.VMEM)

    out = pl.pallas_call(
        _rnn_adding_kernel,
        out_shape=jax.ShapeDtypeStruct((B_pad, OUT_LANES), jnp.float32),
        in_specs=[vmem_spec, vmem_spec, vmem_spec, vmem_spec],   # whole arrays, VMEM-resident
        out_specs=vmem_spec,
    )(xw_pad, whh_pad, wf_pad, bf_pad)

    return out[:B, 0]                                     # matches .squeeze() -> (batch,)


def _reference_forward(x, params):
    w_ih, w_hh, b_ih, b_hh, w_f, b_f = params
    B, S, I = x.shape
    H = w_hh.shape[0]
    h = jnp.zeros((B, H), jnp.float32)
    for t in range(S):
        h = jnp.tanh(x[:, t, :] @ w_ih.T + b_ih + h @ w_hh.T + b_hh)
    return (h @ w_f.reshape(H, 1) + b_f).reshape(B)


def make_params(key, input_size, hidden_size):
    ks = jax.random.split(key, 6)
    scale = 1.0 / jnp.sqrt(hidden_size)
    w_ih = jax.random.uniform(ks[0], (hidden_size, input_size), jnp.float32, -scale, scale)
    w_hh = jax.random.uniform(ks[1], (hidden_size, hidden_size), jnp.float32, -scale, scale)
    b_ih = jax.random.uniform(ks[2], (hidden_size,), jnp.float32, -scale, scale)
    b_hh = jax.random.uniform(ks[3], (hidden_size,), jnp.float32, -scale, scale)
    w_f = jax.random.uniform(ks[4], (1, hidden_size), jnp.float32, -scale, scale)
    b_f = jax.random.uniform(ks[5], (1,), jnp.float32, -scale, scale)
    return (w_ih, w_hh, b_ih, b_hh, w_f, b_f)


if __name__ == "__main__":
    batch, seq, input_size, hidden_size = 8, 8, 2, 32
    key = jax.random.PRNGKey(0)
    k_x, k_p = jax.random.split(key)
    # Adding-problem input: (value, marker) pairs -> input_size = 2, batch_first.
    x = jax.random.uniform(k_x, (batch, seq, input_size), jnp.float32)
    params = make_params(k_p, input_size, hidden_size)

    out = adding_problem_rnn_forward(x, params)
    out = jax.block_until_ready(out)

    ref = _reference_forward(x, params)
    assert out.shape == (batch,)
    assert jnp.allclose(out, ref, atol=1e-5, rtol=1e-5), (out, ref)
    print("KERNEL_OK")
</pallas_src>

<mosaic_0001>
module attributes {stable_mosaic.version = 11 : i64} {
  func.func @_rnn_adding_kernel(%arg0: memref<8x8x128xf32, #tpu.memory_space<vmem>>, %arg1: memref<128x128xf32, #tpu.memory_space<vmem>>, %arg2: memref<128x128xf32, #tpu.memory_space<vmem>>, %arg3: memref<1x128xf32, #tpu.memory_space<vmem>>, %arg4: memref<8x128xf32, #tpu.memory_space<vmem>>) attributes {dimension_semantics = [], scalar_prefetch = 0 : i64, scratch_operands = 0 : i64, tpu.core_type = #tpu.core_type<tc>} {
    %c0 = arith.constant 0 : index
    %c0_0 = arith.constant 0 : index
    %0 = vector.load %arg1[%c0, %c0_0] : memref<128x128xf32, #tpu.memory_space<vmem>>, vector<128x128xf32>
    %cst = arith.constant 0.000000e+00 : f32
    %1 = vector.broadcast %cst : f32 to vector<8x128xf32>
    %c0_i32 = arith.constant 0 : i32
    %2 = arith.index_cast %c0_i32 : i32 to index
    %c0_1 = arith.constant 0 : index
    %c0_2 = arith.constant 0 : index
    %3 = vector.load %arg0[%2, %c0_1, %c0_2] : memref<8x8x128xf32, #tpu.memory_space<vmem>>, vector<1x8x128xf32>
    %4 = vector.shape_cast %3 : vector<1x8x128xf32> to vector<8x128xf32>
    %cst_3 = arith.constant dense<0.000000e+00> : vector<8x128xf32>
    %5 = tpu.matmul %1, %0, %cst_3 {dimension_numbers = #tpu.dot_dimension_numbers<[1], [0], [0], [1], [0, 0, 1, 1], [], []>} : vector<8x128xf32>, vector<128x128xf32>, vector<8x128xf32> -> vector<8x128xf32>
    %6 = arith.addf %4, %5 : vector<8x128xf32>
    %7 = math.tanh %6 : vector<8x128xf32>
    %c1_i32 = arith.constant 1 : i32
    %8 = arith.index_cast %c1_i32 : i32 to index
    %c0_4 = arith.constant 0 : index
    %c0_5 = arith.constant 0 : index
    %9 = vector.load %arg0[%8, %c0_4, %c0_5] : memref<8x8x128xf32, #tpu.memory_space<vmem>>, vector<1x8x128xf32>
    %10 = vector.shape_cast %9 : vector<1x8x128xf32> to vector<8x128xf32>
    %cst_6 = arith.constant dense<0.000000e+00> : vector<8x128xf32>
    %11 = tpu.matmul %7, %0, %cst_6 {dimension_numbers = #tpu.dot_dimension_numbers<[1], [0], [0], [1], [0, 0, 1, 1], [], []>} : vector<8x128xf32>, vector<128x128xf32>, vector<8x128xf32> -> vector<8x128xf32>
    %12 = arith.addf %10, %11 : vector<8x128xf32>
    %13 = math.tanh %12 : vector<8x128xf32>
    %c2_i32 = arith.constant 2 : i32
    %14 = arith.index_cast %c2_i32 : i32 to index
    %c0_7 = arith.constant 0 : index
    %c0_8 = arith.constant 0 : index
    %15 = vector.load %arg0[%14, %c0_7, %c0_8] : memref<8x8x128xf32, #tpu.memory_space<vmem>>, vector<1x8x128xf32>
    %16 = vector.shape_cast %15 : vector<1x8x128xf32> to vector<8x128xf32>
    %cst_9 = arith.constant dense<0.000000e+00> : vector<8x128xf32>
    %17 = tpu.matmul %13, %0, %cst_9 {dimension_numbers = #tpu.dot_dimension_numbers<[1], [0], [0], [1], [0, 0, 1, 1], [], []>} : vector<8x128xf32>, vector<128x128xf32>, vector<8x128xf32> -> vector<8x128xf32>
    %18 = arith.addf %16, %17 : vector<8x128xf32>
    %19 = math.tanh %18 : vector<8x128xf32>
    %c3_i32 = arith.constant 3 : i32
    %20 = arith.index_cast %c3_i32 : i32 to index
    %c0_10 = arith.constant 0 : index
    %c0_11 = arith.constant 0 : index
    %21 = vector.load %arg0[%20, %c0_10, %c0_11] : memref<8x8x128xf32, #tpu.memory_space<vmem>>, vector<1x8x128xf32>
    %22 = vector.shape_cast %21 : vector<1x8x128xf32> to vector<8x128xf32>
    %cst_12 = arith.constant dense<0.000000e+00> : vector<8x128xf32>
    %23 = tpu.matmul %19, %0, %cst_12 {dimension_numbers = #tpu.dot_dimension_numbers<[1], [0], [0], [1], [0, 0, 1, 1], [], []>} : vector<8x128xf32>, vector<128x128xf32>, vector<8x128xf32> -> vector<8x128xf32>
    %24 = arith.addf %22, %23 : vector<8x128xf32>
    %25 = math.tanh %24 : vector<8x128xf32>
    %c4_i32 = arith.constant 4 : i32
    %26 = arith.index_cast %c4_i32 : i32 to index
    %c0_13 = arith.constant 0 : index
    %c0_14 = arith.constant 0 : index
    %27 = vector.load %arg0[%26, %c0_13, %c0_14] : memref<8x8x128xf32, #tpu.memory_space<vmem>>, vector<1x8x128xf32>
    %28 = vector.shape_cast %27 : vector<1x8x128xf32> to vector<8x128xf32>
    %cst_15 = arith.constant dense<0.000000e+00> : vector<8x128xf32>
    %29 = tpu.matmul %25, %0, %cst_15 {dimension_numbers = #tpu.dot_dimension_numbers<[1], [0], [0], [1], [0, 0, 1, 1], [], []>} : vector<8x128xf32>, vector<128x128xf32>, vector<8x128xf32> -> vector<8x128xf32>
    %30 = arith.addf %28, %29 : vector<8x128xf32>
    %31 = math.tanh %30 : vector<8x128xf32>
    %c5_i32 = arith.constant 5 : i32
    %32 = arith.index_cast %c5_i32 : i32 to index
    %c0_16 = arith.constant 0 : index
    %c0_17 = arith.constant 0 : index
    %33 = vector.load %arg0[%32, %c0_16, %c0_17] : memref<8x8x128xf32, #tpu.memory_space<vmem>>, vector<1x8x128xf32>
    %34 = vector.shape_cast %33 : vector<1x8x128xf32> to vector<8x128xf32>
    %cst_18 = arith.constant dense<0.000000e+00> : vector<8x128xf32>
    %35 = tpu.matmul %31, %0, %cst_18 {dimension_numbers = #tpu.dot_dimension_numbers<[1], [0], [0], [1], [0, 0, 1, 1], [], []>} : vector<8x128xf32>, vector<128x128xf32>, vector<8x128xf32> -> vector<8x128xf32>
    %36 = arith.addf %34, %35 : vector<8x128xf32>
    %37 = math.tanh %36 : vector<8x128xf32>
    %c6_i32 = arith.constant 6 : i32
    %38 = arith.index_cast %c6_i32 : i32 to index
    %c0_19 = arith.constant 0 : index
    %c0_20 = arith.constant 0 : index
    %39 = vector.load %arg0[%38, %c0_19, %c0_20] : memref<8x8x128xf32, #tpu.memory_space<vmem>>, vector<1x8x128xf32>
    %40 = vector.shape_cast %39 : vector<1x8x128xf32> to vector<8x128xf32>
    %cst_21 = arith.constant dense<0.000000e+00> : vector<8x128xf32>
    %41 = tpu.matmul %37, %0, %cst_21 {dimension_numbers = #tpu.dot_dimension_numbers<[1], [0], [0], [1], [0, 0, 1, 1], [], []>} : vector<8x128xf32>, vector<128x128xf32>, vector<8x128xf32> -> vector<8x128xf32>
    %42 = arith.addf %40, %41 : vector<8x128xf32>
    %43 = math.tanh %42 : vector<8x128xf32>
    %c7_i32 = arith.constant 7 : i32
    %44 = arith.index_cast %c7_i32 : i32 to index
    %c0_22 = arith.constant 0 : index
    %c0_23 = arith.constant 0 : index
    %45 = vector.load %arg0[%44, %c0_22, %c0_23] : memref<8x8x128xf32, #tpu.memory_space<vmem>>, vector<1x8x128xf32>
    %46 = vector.shape_cast %45 : vector<1x8x128xf32> to vector<8x128xf32>
    %cst_24 = arith.constant dense<0.000000e+00> : vector<8x128xf32>
    %47 = tpu.matmul %43, %0, %cst_24 {dimension_numbers = #tpu.dot_dimension_numbers<[1], [0], [0], [1], [0, 0, 1, 1], [], []>} : vector<8x128xf32>, vector<128x128xf32>, vector<8x128xf32> -> vector<8x128xf32>
    %48 = arith.addf %46, %47 : vector<8x128xf32>
    %49 = math.tanh %48 : vector<8x128xf32>
    %c8_i32 = arith.constant 8 : i32
    %c0_25 = arith.constant 0 : index
    %c0_26 = arith.constant 0 : index
    %50 = vector.load %arg2[%c0_25, %c0_26] : memref<128x128xf32, #tpu.memory_space<vmem>>, vector<128x128xf32>
    %cst_27 = arith.constant dense<0.000000e+00> : vector<8x128xf32>
    %51 = tpu.matmul %49, %50, %cst_27 {dimension_numbers = #tpu.dot_dimension_numbers<[1], [0], [0], [1], [0, 0, 1, 1], [], []>} : vector<8x128xf32>, vector<128x128xf32>, vector<8x128xf32> -> vector<8x128xf32>
    %c0_28 = arith.constant 0 : index
    %c0_29 = arith.constant 0 : index
    %52 = vector.load %arg3[%c0_28, %c0_29] : memref<1x128xf32, #tpu.memory_space<vmem>>, vector<1x128xf32>
    %53 = vector.broadcast %52 : vector<1x128xf32> to vector<8x128xf32>
    %54 = arith.addf %51, %53 : vector<8x128xf32>
    %c0_30 = arith.constant 0 : index
    %c0_31 = arith.constant 0 : index
    %55 = vector.load %arg4[%c0_30, %c0_31] : memref<8x128xf32, #tpu.memory_space<vmem>>, vector<8x128xf32>
    tpu.vector_store %arg4[%c0_30, %c0_31], %54 {strides = array<i32>} : memref<8x128xf32, #tpu.memory_space<vmem>>, vector<8x128xf32>,
    return
  }
}

</mosaic_0001>

<llo_original>
// kernel: tpu_custom_call.1
$region0: #{tpu_custom_call.1}
  #allocation0 [shape = 'u32[]', space=smem, size = 0x4, offset = 0x4, fixed_abs, tag = 'smem constant byte address 0x4 - core index']
  #allocation1 [shape = 'u32[144,128]{1,0:T(1,128)}', space=vmem, size = 0x12000, scoped, tag = 'internal scratch']
  %s0 = inlined_call_operand.hbm [shape: f32[8,8,128], index: 0, kind: input, shape index: {}]
  %s1 = inlined_call_operand.hbm [shape: f32[128,128], index: 1, kind: input, shape index: {}]
  %s2 = inlined_call_operand.hbm [shape: f32[128,128], index: 2, kind: input, shape index: {}]
  %s3 = inlined_call_operand.vmem [shape: f32[1,128], index: 3, kind: input, shape index: {}]
  %s4 = inlined_call_operand.hbm [shape: f32[8,128], index: 4, kind: output, shape index: {}]
  %s5 = sld [smem:[#allocation0]]
  $region38: #{tpu_custom_call.1} parent=0
    _
  %s7 = ssub.s32 1, %s5
  %s8 = scalar_select 0, %s7, %s5
  $region1: #{tpu_custom_call.1} parent=0
    #allocation2 [shape = 'u8[32768]{0}', space=vmem, size = 0x8000, scoped, tag = 'input window, operand 0, single buffered']
    #allocation3 [shape = 's32[1]{0}', space=sflag, size = 0x4, scoped, tag = 'scoped memory for tpu_custom_call.1']
    #allocation4 [shape = 's32[1]{0}', space=sflag, size = 0x4, scoped, tag = 'scoped memory for tpu_custom_call.1']
    #allocation5 [shape = 'u8[65536]{0}', space=vmem, size = 0x10000, scoped, tag = 'input window, operand 1, single buffered']
    #allocation6 [shape = 's32[1]{0}', space=sflag, size = 0x4, scoped, tag = 'scoped memory for tpu_custom_call.1']
    #allocation7 [shape = 'u8[65536]{0}', space=vmem, size = 0x10000, scoped, tag = 'input window, operand 2, single buffered']
    #allocation8 [shape = 'u8[4096]{0}', space=vmem, size = 0x1000, scoped, tag = 'output window, operand 0, single buffered']
    %9 = vsyncpa [#allocation3], 0
    %10 = vsyncpa [#allocation6], 0
    %11 = vsyncpa [#allocation4], 0
    // Predicated region
    $region2: #{tpu_custom_call.1} parent=1 // pred_check
      _
    $region3: #{tpu_custom_call.1} parent=1 // pred_check_branch
      %13 = sbr.rel (0) target = $region5
    $region4: #{tpu_custom_call.1} parent=1 // pred_region
      %s15 = ssub.s32 1024, 1024
      %16 = vsyncadd [#allocation3], %s15
      %s17 = sshll.u32 [#allocation2], 4
      %s18 = int_to_ptr.vmem [resolvable:$true] %s17
      %23 = dma.hbm_to_vmem [thread:$0]  %s0, 1024, %s18, [#allocation3], 128, 128, 8
    $region5: #{tpu_custom_call.1} parent=1 // pred_fallthru
      _
    // Predicated region
    $region6: #{tpu_custom_call.1} parent=1 // pred_check
      _
    $region7: #{tpu_custom_call.1} parent=1 // pred_check_branch
      %25 = sbr.rel (0) target = $region9
    $region8: #{tpu_custom_call.1} parent=1 // pred_region
      %s27 = ssub.s32 2048, 2048
      %28 = vsyncadd [#allocation6], %s27
      %s29 = sshll.u32 [#allocation5], 4
      %s30 = int_to_ptr.vmem [resolvable:$true] %s29
      %35 = dma.hbm_to_vmem [thread:$0]  %s1, 2048, %s30, [#allocation6], 128, 128, 8
    $region9: #{tpu_custom_call.1} parent=1 // pred_fallthru
      _
    // Predicated region
    $region10: #{tpu_custom_call.1} parent=1 // pred_check
      _
    $region11: #{tpu_custom_call.1} parent=1 // pred_check_branch
      %37 = sbr.rel (0) target = $region13
    $region12: #{tpu_custom_call.1} parent=1 // pred_region
      %s39 = ssub.s32 2048, 2048
      %40 = vsyncadd [#allocation6], %s39
      %s41 = sshll.u32 [#allocation7], 4
      %s42 = int_to_ptr.vmem [resolvable:$true] %s41
      %47 = dma.hbm_to_vmem [thread:$0]  %s2, 2048, %s42, [#allocation6], 128, 128, 8
    $region13: #{tpu_custom_call.1} parent=1 // pred_fallthru
      _
    // Predicated region
    $region14: #{tpu_custom_call.1} parent=1 // pred_check
      _
    $region15: #{tpu_custom_call.1} parent=1 // pred_check_branch
      %49 = sbr.rel (0) target = $region17
    $region16: #{tpu_custom_call.1} parent=1 // pred_region
      _
    $region17: #{tpu_custom_call.1} parent=1 // pred_fallthru
      _
    // Predicated region
    $region18: #{tpu_custom_call.1} parent=1 // pred_check
      _
    $region19: #{tpu_custom_call.1} parent=1 // pred_check_branch
      %51 = sbr.rel (0) target = $region21
    $region20: #{tpu_custom_call.1} parent=1 // pred_region
      %52 = dma.done [#allocation3], 1024
    $region21: #{tpu_custom_call.1} parent=1 // pred_fallthru
      _
    // Predicated region
    $region22: #{tpu_custom_call.1} parent=1 // pred_check
      _
    $region23: #{tpu_custom_call.1} parent=1 // pred_check_branch
      %54 = sbr.rel (0) target = $region25
    $region24: #{tpu_custom_call.1} parent=1 // pred_region
      %55 = dma.done [#allocation6], 2048
    $region25: #{tpu_custom_call.1} parent=1 // pred_fallthru
      _
    // Predicated region
    $region26: #{tpu_custom_call.1} parent=1 // pred_check
      _
    $region27: #{tpu_custom_call.1} parent=1 // pred_check_branch
      %57 = sbr.rel (0) target = $region29
    $region28: #{tpu_custom_call.1} parent=1 // pred_region
      %58 = dma.done [#allocation6], 2048
    $region29: #{tpu_custom_call.1} parent=1 // pred_fallthru
      _
    %v59 = vld [vmem:[#allocation5] sm:$0xff]
    %v60 = vld [vmem:[#allocation5 + $0x8] sm:$0xff]
    %v61 = vld [vmem:[#allocation5 + $0x10] sm:$0xff]
    %v62 = vld [vmem:[#allocation5 + $0x18] sm:$0xff]
    %v63 = vld [vmem:[#allocation5 + $0x20] sm:$0xff]
    %v64 = vld [vmem:[#allocation5 + $0x28] sm:$0xff]
    %v65 = vld [vmem:[#allocation5 + $0x30] sm:$0xff]
    %v66 = vld [vmem:[#allocation5 + $0x38] sm:$0xff]
    %v67 = vld [vmem:[#allocation5 + $0x40] sm:$0xff]
    %v68 = vld [vmem:[#allocation5 + $0x48] sm:$0xff]
    %v69 = vld [vmem:[#allocation5 + $0x50] sm:$0xff]
    %v70 = vld [vmem:[#allocation5 + $0x58] sm:$0xff]
    %v71 = vld [vmem:[#allocation5 + $0x60] sm:$0xff]
    %v72 = vld [vmem:[#allocation5 + $0x68] sm:$0xff]
    %v73 = vld [vmem:[#allocation5 + $0x70] sm:$0xff]
    %v74 = vld [vmem:[#allocation5 + $0x78] sm:$0xff]
    %v75 = vld [vmem:[#allocation2] sm:$0xff]
    %76 = vmatprep.subr.mxu0 0.0
    %77 = vmatpush1.msra.mxu0 %v59
    %78 = vmatprep.subr.mxu0 0.0
    %79 = vmatpush1.msra.mxu0 %v60
    %80 = vmatprep.subr.mxu0 0.0
    %81 = vmatpush1.msra.mxu0 %v61
    %82 = vmatprep.subr.mxu0 0.0
    %83 = vmatpush1.msra.mxu0 %v62
    %84 = vmatprep.subr.mxu0 0.0
    %85 = vmatpush1.msra.mxu0 %v63
    %86 = vmatprep.subr.mxu0 0.0
    %87 = vmatpush1.msra.mxu0 %v64
    %88 = vmatprep.subr.mxu0 0.0
    %89 = vmatpush1.msra.mxu0 %v65
    %90 = vmatprep.subr.mxu0 0.0
    %91 = vmatpush1.msra.mxu0 %v66
    %92 = vmatprep.subr.mxu0 0.0
    %93 = vmatpush1.msra.mxu0 %v67
    %94 = vmatprep.subr.mxu0 0.0
    %95 = vmatpush1.msra.mxu0 %v68
    %96 = vmatprep.subr.mxu0 0.0
    %97 = vmatpush1.msra.mxu0 %v69
    %98 = vmatprep.subr.mxu0 0.0
    %99 = vmatpush1.msra.mxu0 %v70
    %100 = vmatprep.subr.mxu0 0.0
    %101 = vmatpush1.msra.mxu0 %v71
    %102 = vmatprep.subr.mxu0 0.0
    %103 = vmatpush1.msra.mxu0 %v72
    %104 = vmatprep.subr.mxu0 0.0
    %105 = vmatpush1.msra.mxu0 %v73
    %106 = vmatprep.subr.mxu0 0.0
    %107 = vmatpush1.msra.mxu0 %v74
    %108 = vmatprep.subr.mxu0 0.0
    %109 = vmatpush1.msra.mxu0 0.0
    %110 = vmatprep.subr.mxu0 0.0
    %111 = vmatpush1.msra.mxu0 0.0
    %112 = vmatprep.subr.mxu0 0.0
    %113 = vmatpush1.msra.mxu0 0.0
    %114 = vmatprep.subr.mxu0 0.0
    %115 = vmatpush1.msra.mxu0 0.0
    %116 = vmatprep.subr.mxu0 0.0
    %117 = vmatpush1.msra.mxu0 0.0
    %118 = vmatprep.subr.mxu0 0.0
    %119 = vmatpush1.msra.mxu0 0.0
    %120 = vmatprep.subr.mxu0 0.0
    %121 = vmatpush1.msra.mxu0 0.0
    %122 = vmatprep.subr.mxu0 0.0
    %123 = vmatpush1.msra.mxu0 0.0
    %124 = vmatprep.subr.mxu0 0.0
    %125 = vmatpush1.msra.mxu0 0.0
    %126 = vmatprep.subr.mxu0 0.0
    %127 = vmatpush1.msra.mxu0 0.0
    %128 = vmatprep.subr.mxu0 0.0
    %129 = vmatpush1.msra.mxu0 0.0
    %130 = vmatprep.subr.mxu0 0.0
    %131 = vmatpush1.msra.mxu0 0.0
    %132 = vmatprep.subr.mxu0 0.0
    %133 = vmatpush1.msra.mxu0 0.0
    %134 = vmatprep.subr.mxu0 0.0
    %135 = vmatpush1.msra.mxu0 0.0
    %136 = vmatprep.subr.mxu0 0.0
    %137 = vmatpush1.msra.mxu0 0.0
    %138 = vmatprep.subr.mxu0 0.0
    %139 = vmatpush1.msra.mxu0 0.0
    %140 = vmatprep.mubr.f32.mxu0 0.0
    %141 = vmatmul.mubr.f32.gmra.mrb[0].mxu0 0.0
    %v142 = vpop.f32.mrb[0].mxu0
    %v143 = vadd.f32 0.0, %v142
    %v144 = vpop.f32.mrb[0].mxu0
    %145 = vdwg.mxu0
    %v146 = vadd.f32 %v75, %v143
    %v147 = vtanh.pop %v146
    %s148 = scalar_lea.vmem [#allocation2], 8
    %v149 = vld [vmem:[%s148] sm:$0xff]
    %150 = vmatprep.subr.mxu0 0.0
    %151 = vmatpush1.msra.mxu0 %v59
    %152 = vmatprep.subr.mxu0 0.0
    %153 = vmatpush1.msra.mxu0 %v60
    %154 = vmatprep.subr.mxu0 0.0
    %155 = vmatpush1.msra.mxu0 %v61
    %156 = vmatprep.subr.mxu0 0.0
    %157 = vmatpush1.msra.mxu0 %v62
    %158 = vmatprep.subr.mxu0 0.0
    %159 = vmatpush1.msra.mxu0 %v63
    %160 = vmatprep.subr.mxu0 0.0
    %161 = vmatpush1.msra.mxu0 %v64
    %162 = vmatprep.subr.mxu0 0.0
    %163 = vmatpush1.msra.mxu0 %v65
    %164 = vmatprep.subr.mxu0 0.0
    %165 = vmatpush1.msra.mxu0 %v66
    %166 = vmatprep.subr.mxu0 0.0
    %167 = vmatpush1.msra.mxu0 %v67
    %168 = vmatprep.subr.mxu0 0.0
    %169 = vmatpush1.msra.mxu0 %v68
    %170 = vmatprep.subr.mxu0 0.0
    %171 = vmatpush1.msra.mxu0 %v69
    %172 = vmatprep.subr.mxu0 0.0
    %173 = vmatpush1.msra.mxu0 %v70
    %174 = vmatprep.subr.mxu0 0.0
    %175 = vmatpush1.msra.mxu0 %v71
    %176 = vmatprep.subr.mxu0 0.0
    %177 = vmatpush1.msra.mxu0 %v72
    %178 = vmatprep.subr.mxu0 0.0
    %179 = vmatpush1.msra.mxu0 %v73
    %180 = vmatprep.subr.mxu0 0.0
    %181 = vmatpush1.msra.mxu0 %v74
    %182 = vmatprep.subr.mxu0 0.0
    %183 = vmatpush1.msra.mxu0 0.0
    %184 = vmatprep.subr.mxu0 0.0
    %185 = vmatpush1.msra.mxu0 0.0
    %186 = vmatprep.subr.mxu0 0.0
    %187 = vmatpush1.msra.mxu0 0.0
    %188 = vmatprep.subr.mxu0 0.0
    %189 = vmatpush1.msra.mxu0 0.0
    %190 = vmatprep.subr.mxu0 0.0
    %191 = vmatpush1.msra.mxu0 0.0
    %192 = vmatprep.subr.mxu0 0.0
    %193 = vmatpush1.msra.mxu0 0.0
    %194 = vmatprep.subr.mxu0 0.0
    %195 = vmatpush1.msra.mxu0 0.0
    %196 = vmatprep.subr.mxu0 0.0
    %197 = vmatpush1.msra.mxu0 0.0
    %198 = vmatprep.subr.mxu0 0.0
    %199 = vmatpush1.msra.mxu0 0.0
    %200 = vmatprep.subr.mxu0 0.0
    %201 = vmatpush1.msra.mxu0 0.0
    %202 = vmatprep.subr.mxu0 0.0
    %203 = vmatpush1.msra.mxu0 0.0
    %204 = vmatprep.subr.mxu0 0.0
    %205 = vmatpush1.msra.mxu0 0.0
    %206 = vmatprep.subr.mxu0 0.0
    %207 = vmatpush1.msra.mxu0 0.0
    %208 = vmatprep.subr.mxu0 0.0
    %209 = vmatpush1.msra.mxu0 0.0
    %210 = vmatprep.subr.mxu0 0.0
    %211 = vmatpush1.msra.mxu0 0.0
    %212 = vmatprep.subr.mxu0 0.0
    %213 = vmatpush1.msra.mxu0 0.0
    %214 = vmatprep.mubr.f32.mxu0 0.0
    %215 = vmatmul.mubr.f32.gmra.mrb[0].mxu0 %v147
    %v216 = vpop.f32.mrb[0].mxu0
    %v217 = vadd.f32 0.0, %v216
    %v218 = vpop.f32.mrb[0].mxu0
    %219 = vdwg.mxu0
    %v220 = vadd.f32 %v149, %v217
    %v221 = vtanh.pop %v220
    %s222 = scalar_lea.vmem [#allocation2], 16
    %v223 = vld [vmem:[%s222] sm:$0xff]
    %224 = vmatprep.subr.mxu0 0.0
    %225 = vmatpush1.msra.mxu0 %v59
    %226 = vmatprep.subr.mxu0 0.0
    %227 = vmatpush1.msra.mxu0 %v60
    %228 = vmatprep.subr.mxu0 0.0
    %229 = vmatpush1.msra.mxu0 %v61
    %230 = vmatprep.subr.mxu0 0.0
    %231 = vmatpush1.msra.mxu0 %v62
    %232 = vmatprep.subr.mxu0 0.0
    %233 = vmatpush1.msra.mxu0 %v63
    %234 = vmatprep.subr.mxu0 0.0
    %235 = vmatpush1.msra.mxu0 %v64
    %236 = vmatprep.subr.mxu0 0.0
    %237 = vmatpush1.msra.mxu0 %v65
    %238 = vmatprep.subr.mxu0 0.0
    %239 = vmatpush1.msra.mxu0 %v66
    %240 = vmatprep.subr.mxu0 0.0
    %241 = vmatpush1.msra.mxu0 %v67
    %242 = vmatprep.subr.mxu0 0.0
    %243 = vmatpush1.msra.mxu0 %v68
    %244 = vmatprep.subr.mxu0 0.0
    %245 = vmatpush1.msra.mxu0 %v69
    %246 = vmatprep.subr.mxu0 0.0
    %247 = vmatpush1.msra.mxu0 %v70
    %248 = vmatprep.subr.mxu0 0.0
    %249 = vmatpush1.msra.mxu0 %v71
    %250 = vmatprep.subr.mxu0 0.0
    %251 = vmatpush1.msra.mxu0 %v72
    %252 = vmatprep.subr.mxu0 0.0
    %253 = vmatpush1.msra.mxu0 %v73
    %254 = vmatprep.subr.mxu0 0.0
    %255 = vmatpush1.msra.mxu0 %v74
    %256 = vmatprep.subr.mxu0 0.0
    %257 = vmatpush1.msra.mxu0 0.0
    %258 = vmatprep.subr.mxu0 0.0
    %259 = vmatpush1.msra.mxu0 0.0
    %260 = vmatprep.subr.mxu0 0.0
    %261 = vmatpush1.msra.mxu0 0.0
    %262 = vmatprep.subr.mxu0 0.0
    %263 = vmatpush1.msra.mxu0 0.0
    %264 = vmatprep.subr.mxu0 0.0
    %265 = vmatpush1.msra.mxu0 0.0
    %266 = vmatprep.subr.mxu0 0.0
    %267 = vmatpush1.msra.mxu0 0.0
    %268 = vmatprep.subr.mxu0 0.0
    %269 = vmatpush1.msra.mxu0 0.0
    %270 = vmatprep.subr.mxu0 0.0
    %271 = vmatpush1.msra.mxu0 0.0
    %272 = vmatprep.subr.mxu0 0.0
    %273 = vmatpush1.msra.mxu0 0.0
    %274 = vmatprep.subr.mxu0 0.0
    %275 = vmatpush1.msra.mxu0 0.0
    %276 = vmatprep.subr.mxu0 0.0
    %277 = vmatpush1.msra.mxu0 0.0
    %278 = vmatprep.subr.mxu0 0.0
    %279 = vmatpush1.msra.mxu0 0.0
    %280 = vmatprep.subr.mxu0 0.0
    %281 = vmatpush1.msra.mxu0 0.0
    %282 = vmatprep.subr.mxu0 0.0
    %283 = vmatpush1.msra.mxu0 0.0
    %284 = vmatprep.subr.mxu0 0.0
    %285 = vmatpush1.msra.mxu0 0.0
    %286 = vmatprep.subr.mxu0 0.0
    %287 = vmatpush1.msra.mxu0 0.0
    %288 = vmatprep.mubr.f32.mxu0 0.0
    %289 = vmatmul.mubr.f32.gmra.mrb[0].mxu0 %v221
    %v290 = vpop.f32.mrb[0].mxu0
    %v291 = vadd.f32 0.0, %v290
    %v292 = vpop.f32.mrb[0].mxu0
    %293 = vdwg.mxu0
    %v294 = vadd.f32 %v223, %v291
    %v295 = vtanh.pop %v294
    %s296 = scalar_lea.vmem [#allocation2], 24
    %v297 = vld [vmem:[%s296] sm:$0xff]
    %298 = vmatprep.subr.mxu0 0.0
    %299 = vmatpush1.msra.mxu0 %v59
    %300 = vmatprep.subr.mxu0 0.0
    %301 = vmatpush1.msra.mxu0 %v60
    %302 = vmatprep.subr.mxu0 0.0
    %303 = vmatpush1.msra.mxu0 %v61
    %304 = vmatprep.subr.mxu0 0.0
    %305 = vmatpush1.msra.mxu0 %v62
    %306 = vmatprep.subr.mxu0 0.0
    %307 = vmatpush1.msra.mxu0 %v63
    %308 = vmatprep.subr.mxu0 0.0
    %309 = vmatpush1.msra.mxu0 %v64
    %310 = vmatprep.subr.mxu0 0.0
    %311 = vmatpush1.msra.mxu0 %v65
    %312 = vmatprep.subr.mxu0 0.0
    %313 = vmatpush1.msra.mxu0 %v66
    %314 = vmatprep.subr.mxu0 0.0
    %315 = vmatpush1.msra.mxu0 %v67
    %316 = vmatprep.subr.mxu0 0.0
    %317 = vmatpush1.msra.mxu0 %v68
    %318 = vmatprep.subr.mxu0 0.0
    %319 = vmatpush1.msra.mxu0 %v69
    %320 = vmatprep.subr.mxu0 0.0
    %321 = vmatpush1.msra.mxu0 %v70
    %322 = vmatprep.subr.mxu0 0.0
    %323 = vmatpush1.msra.mxu0 %v71
    %324 = vmatprep.subr.mxu0 0.0
    %325 = vmatpush1.msra.mxu0 %v72
    %326 = vmatprep.subr.mxu0 0.0
    %327 = vmatpush1.msra.mxu0 %v73
    %328 = vmatprep.subr.mxu0 0.0
    %329 = vmatpush1.msra.mxu0 %v74
    %330 = vmatprep.subr.mxu0 0.0
    %331 = vmatpush1.msra.mxu0 0.0
    %332 = vmatprep.subr.mxu0 0.0
    %333 = vmatpush1.msra.mxu0 0.0
    %334 = vmatprep.subr.mxu0 0.0
    %335 = vmatpush1.msra.mxu0 0.0
    %336 = vmatprep.subr.mxu0 0.0
    %337 = vmatpush1.msra.mxu0 0.0
    %338 = vmatprep.subr.mxu0 0.0
    %339 = vmatpush1.msra.mxu0 0.0
    %340 = vmatprep.subr.mxu0 0.0
    %341 = vmatpush1.msra.mxu0 0.0
    %342 = vmatprep.subr.mxu0 0.0
    %343 = vmatpush1.msra.mxu0 0.0
    %344 = vmatprep.subr.mxu0 0.0
    %345 = vmatpush1.msra.mxu0 0.0
    %346 = vmatprep.subr.mxu0 0.0
    %347 = vmatpush1.msra.mxu0 0.0
    %348 = vmatprep.subr.mxu0 0.0
    %349 = vmatpush1.msra.mxu0 0.0
    %350 = vmatprep.subr.mxu0 0.0
    %351 = vmatpush1.msra.mxu0 0.0
    %352 = vmatprep.subr.mxu0 0.0
    %353 = vmatpush1.msra.mxu0 0.0
    %354 = vmatprep.subr.mxu0 0.0
    %355 = vmatpush1.msra.mxu0 0.0
    %356 = vmatprep.subr.mxu0 0.0
    %357 = vmatpush1.msra.mxu0 0.0
    %358 = vmatprep.subr.mxu0 0.0
    %359 = vmatpush1.msra.mxu0 0.0
    %360 = vmatprep.subr.mxu0 0.0
    %361 = vmatpush1.msra.mxu0 0.0
    %362 = vmatprep.mubr.f32.mxu0 0.0
    %363 = vmatmul.mubr.f32.gmra.mrb[0].mxu0 %v295
    %v364 = vpop.f32.mrb[0].mxu0
    %v365 = vadd.f32 0.0, %v364
    %v366 = vpop.f32.mrb[0].mxu0
    %367 = vdwg.mxu0
    %v368 = vadd.f32 %v297, %v365
    %v369 = vtanh.pop %v368
    %s370 = scalar_lea.vmem [#allocation2], 32
    %v371 = vld [vmem:[%s370] sm:$0xff]
    %372 = vmatprep.subr.mxu0 0.0
    %373 = vmatpush1.msra.mxu0 %v59
    %374 = vmatprep.subr.mxu0 0.0
    %375 = vmatpush1.msra.mxu0 %v60
    %376 = vmatprep.subr.mxu0 0.0
    %377 = vmatpush1.msra.mxu0 %v61
    %378 = vmatprep.subr.mxu0 0.0
    %379 = vmatpush1.msra.mxu0 %v62
    %380 = vmatprep.subr.mxu0 0.0
    %381 = vmatpush1.msra.mxu0 %v63
    %382 = vmatprep.subr.mxu0 0.0
    %383 = vmatpush1.msra.mxu0 %v64
    %384 = vmatprep.subr.mxu0 0.0
    %385 = vmatpush1.msra.mxu0 %v65
    %386 = vmatprep.subr.mxu0 0.0
    %387 = vmatpush1.msra.mxu0 %v66
    %388 = vmatprep.subr.mxu0 0.0
    %389 = vmatpush1.msra.mxu0 %v67
    %390 = vmatprep.subr.mxu0 0.0
    %391 = vmatpush1.msra.mxu0 %v68
    %392 = vmatprep.subr.mxu0 0.0
    %393 = vmatpush1.msra.mxu0 %v69
    %394 = vmatprep.subr.mxu0 0.0
    %395 = vmatpush1.msra.mxu0 %v70
    %396 = vmatprep.subr.mxu0 0.0
    %397 = vmatpush1.msra.mxu0 %v71
    %398 = vmatprep.subr.mxu0 0.0
    %399 = vmatpush1.msra.mxu0 %v72
    %400 = vmatprep.subr.mxu0 0.0
    %401 = vmatpush1.msra.mxu0 %v73
    %402 = vmatprep.subr.mxu0 0.0
    %403 = vmatpush1.msra.mxu0 %v74
    %404 = vmatprep.subr.mxu0 0.0
    %405 = vmatpush1.msra.mxu0 0.0
    %406 = vmatprep.subr.mxu0 0.0
    %407 = vmatpush1.msra.mxu0 0.0
    %408 = vmatprep.subr.mxu0 0.0
    %409 = vmatpush1.msra.mxu0 0.0
    %410 = vmatprep.subr.mxu0 0.0
    %411 = vmatpush1.msra.mxu0 0.0
    %412 = vmatprep.subr.mxu0 0.0
    %413 = vmatpush1.msra.mxu0 0.0
    %414 = vmatprep.subr.mxu0 0.0
    %415 = vmatpush1.msra.mxu0 0.0
    %416 = vmatprep.subr.mxu0 0.0
    %417 = vmatpush1.msra.mxu0 0.0
    %418 = vmatprep.subr.mxu0 0.0
    %419 = vmatpush1.msra.mxu0 0.0
    %420 = vmatprep.subr.mxu0 0.0
    %421 = vmatpush1.msra.mxu0 0.0
    %422 = vmatprep.subr.mxu0 0.0
    %423 = vmatpush1.msra.mxu0 0.0
    %424 = vmatprep.subr.mxu0 0.0
    %425 = vmatpush1.msra.mxu0 0.0
    %426 = vmatprep.subr.mxu0 0.0
    %427 = vmatpush1.msra.mxu0 0.0
    %428 = vmatprep.subr.mxu0 0.0
    %429 = vmatpush1.msra.mxu0 0.0
    %430 = vmatprep.subr.mxu0 0.0
    %431 = vmatpush1.msra.mxu0 0.0
    %432 = vmatprep.subr.mxu0 0.0
    %433 = vmatpush1.msra.mxu0 0.0
    %434 = vmatprep.subr.mxu0 0.0
    %435 = vmatpush1.msra.mxu0 0.0
    %436 = vmatprep.mubr.f32.mxu0 0.0
    %437 = vmatmul.mubr.f32.gmra.mrb[0].mxu0 %v369
    %v438 = vpop.f32.mrb[0].mxu0
    %v439 = vadd.f32 0.0, %v438
    %v440 = vpop.f32.mrb[0].mxu0
    %441 = vdwg.mxu0
    %v442 = vadd.f32 %v371, %v439
    %v443 = vtanh.pop %v442
    %s444 = scalar_lea.vmem [#allocation2], 40
    %v445 = vld [vmem:[%s444] sm:$0xff]
    %446 = vmatprep.subr.mxu0 0.0
    %447 = vmatpush1.msra.mxu0 %v59
    %448 = vmatprep.subr.mxu0 0.0
    %449 = vmatpush1.msra.mxu0 %v60
    %450 = vmatprep.subr.mxu0 0.0
    %451 = vmatpush1.msra.mxu0 %v61
    %452 = vmatprep.subr.mxu0 0.0
    %453 = vmatpush1.msra.mxu0 %v62
    %454 = vmatprep.subr.mxu0 0.0
    %455 = vmatpush1.msra.mxu0 %v63
    %456 = vmatprep.subr.mxu0 0.0
    %457 = vmatpush1.msra.mxu0 %v64
    %458 = vmatprep.subr.mxu0 0.0
    %459 = vmatpush1.msra.mxu0 %v65
    %460 = vmatprep.subr.mxu0 0.0
    %461 = vmatpush1.msra.mxu0 %v66
    %462 = vmatprep.subr.mxu0 0.0
    %463 = vmatpush1.msra.mxu0 %v67
    %464 = vmatprep.subr.mxu0 0.0
    %465 = vmatpush1.msra.mxu0 %v68
    %466 = vmatprep.subr.mxu0 0.0
    %467 = vmatpush1.msra.mxu0 %v69
    %468 = vmatprep.subr.mxu0 0.0
    %469 = vmatpush1.msra.mxu0 %v70
    %470 = vmatprep.subr.mxu0 0.0
    %471 = vmatpush1.msra.mxu0 %v71
    %472 = vmatprep.subr.mxu0 0.0
    %473 = vmatpush1.msra.mxu0 %v72
    %474 = vmatprep.subr.mxu0 0.0
    %475 = vmatpush1.msra.mxu0 %v73
    %476 = vmatprep.subr.mxu0 0.0
    %477 = vmatpush1.msra.mxu0 %v74
    %478 = vmatprep.subr.mxu0 0.0
    %479 = vmatpush1.msra.mxu0 0.0
    %480 = vmatprep.subr.mxu0 0.0
    %481 = vmatpush1.msra.mxu0 0.0
    %482 = vmatprep.subr.mxu0 0.0
    %483 = vmatpush1.msra.mxu0 0.0
    %484 = vmatprep.subr.mxu0 0.0
    %485 = vmatpush1.msra.mxu0 0.0
    %486 = vmatprep.subr.mxu0 0.0
    %487 = vmatpush1.msra.mxu0 0.0
    %488 = vmatprep.subr.mxu0 0.0
    %489 = vmatpush1.msra.mxu0 0.0
    %490 = vmatprep.subr.mxu0 0.0
    %491 = vmatpush1.msra.mxu0 0.0
    %492 = vmatprep.subr.mxu0 0.0
    %493 = vmatpush1.msra.mxu0 0.0
    %494 = vmatprep.subr.mxu0 0.0
    %495 = vmatpush1.msra.mxu0 0.0
    %496 = vmatprep.subr.mxu0 0.0
    %497 = vmatpush1.msra.mxu0 0.0
    %498 = vmatprep.subr.mxu0 0.0
    %499 = vmatpush1.msra.mxu0 0.0
    %500 = vmatprep.subr.mxu0 0.0
    %501 = vmatpush1.msra.mxu0 0.0
    %502 = vmatprep.subr.mxu0 0.0
    %503 = vmatpush1.msra.mxu0 0.0
    %504 = vmatprep.subr.mxu0 0.0
    %505 = vmatpush1.msra.mxu0 0.0
    %506 = vmatprep.subr.mxu0 0.0
    %507 = vmatpush1.msra.mxu0 0.0
    %508 = vmatprep.subr.mxu0 0.0
    %509 = vmatpush1.msra.mxu0 0.0
    %510 = vmatprep.mubr.f32.mxu0 0.0
    %511 = vmatmul.mubr.f32.gmra.mrb[0].mxu0 %v443
    %v512 = vpop.f32.mrb[0].mxu0
    %v513 = vadd.f32 0.0, %v512
    %v514 = vpop.f32.mrb[0].mxu0
    %515 = vdwg.mxu0
    %v516 = vadd.f32 %v445, %v513
    %v517 = vtanh.pop %v516
    %s518 = scalar_lea.vmem [#allocation2], 48
    %v519 = vld [vmem:[%s518] sm:$0xff]
    %520 = vmatprep.subr.mxu0 0.0
    %521 = vmatpush1.msra.mxu0 %v59
    %522 = vmatprep.subr.mxu0 0.0
    %523 = vmatpush1.msra.mxu0 %v60
    %524 = vmatprep.subr.mxu0 0.0
    %525 = vmatpush1.msra.mxu0 %v61
    %526 = vmatprep.subr.mxu0 0.0
    %527 = vmatpush1.msra.mxu0 %v62
    %528 = vmatprep.subr.mxu0 0.0
    %529 = vmatpush1.msra.mxu0 %v63
    %530 = vmatprep.subr.mxu0 0.0
    %531 = vmatpush1.msra.mxu0 %v64
    %532 = vmatprep.subr.mxu0 0.0
    %533 = vmatpush1.msra.mxu0 %v65
    %534 = vmatprep.subr.mxu0 0.0
    %535 = vmatpush1.msra.mxu0 %v66
    %536 = vmatprep.subr.mxu0 0.0
    %537 = vmatpush1.msra.mxu0 %v67
    %538 = vmatprep.subr.mxu0 0.0
    %539 = vmatpush1.msra.mxu0 %v68
    %540 = vmatprep.subr.mxu0 0.0
    %541 = vmatpush1.msra.mxu0 %v69
    %542 = vmatprep.subr.mxu0 0.0
    %543 = vmatpush1.msra.mxu0 %v70
    %544 = vmatprep.subr.mxu0 0.0
    %545 = vmatpush1.msra.mxu0 %v71
    %546 = vmatprep.subr.mxu0 0.0
    %547 = vmatpush1.msra.mxu0 %v72
    %548 = vmatprep.subr.mxu0 0.0
    %549 = vmatpush1.msra.mxu0 %v73
    %550 = vmatprep.subr.mxu0 0.0
    %551 = vmatpush1.msra.mxu0 %v74
    %552 = vmatprep.subr.mxu0 0.0
    %553 = vmatpush1.msra.mxu0 0.0
    %554 = vmatprep.subr.mxu0 0.0
    %555 = vmatpush1.msra.mxu0 0.0
    %556 = vmatprep.subr.mxu0 0.0
    %557 = vmatpush1.msra.mxu0 0.0
    %558 = vmatprep.subr.mxu0 0.0
    %559 = vmatpush1.msra.mxu0 0.0
    %560 = vmatprep.subr.mxu0 0.0
    %561 = vmatpush1.msra.mxu0 0.0
    %562 = vmatprep.subr.mxu0 0.0
    %563 = vmatpush1.msra.mxu0 0.0
    %564 = vmatprep.subr.mxu0 0.0
    %565 = vmatpush1.msra.mxu0 0.0
    %566 = vmatprep.subr.mxu0 0.0
    %567 = vmatpush1.msra.mxu0 0.0
    %568 = vmatprep.subr.mxu0 0.0
    %569 = vmatpush1.msra.mxu0 0.0
    %570 = vmatprep.subr.mxu0 0.0
    %571 = vmatpush1.msra.mxu0 0.0
    %572 = vmatprep.subr.mxu0 0.0
    %573 = vmatpush1.msra.mxu0 0.0
    %574 = vmatprep.subr.mxu0 0.0
    %575 = vmatpush1.msra.mxu0 0.0
    %576 = vmatprep.subr.mxu0 0.0
    %577 = vmatpush1.msra.mxu0 0.0
    %578 = vmatprep.subr.mxu0 0.0
    %579 = vmatpush1.msra.mxu0 0.0
    %580 = vmatprep.subr.mxu0 0.0
    %581 = vmatpush1.msra.mxu0 0.0
    %582 = vmatprep.subr.mxu0 0.0
    %583 = vmatpush1.msra.mxu0 0.0
    %584 = vmatprep.mubr.f32.mxu0 0.0
    %585 = vmatmul.mubr.f32.gmra.mrb[0].mxu0 %v517
    %v586 = vpop.f32.mrb[0].mxu0
    %v587 = vadd.f32 0.0, %v586
    %v588 = vpop.f32.mrb[0].mxu0
    %589 = vdwg.mxu0
    %v590 = vadd.f32 %v519, %v587
    %v591 = vtanh.pop %v590
    %s592 = scalar_lea.vmem [#allocation2], 56
    %v593 = vld [vmem:[%s592] sm:$0xff]
    %594 = vmatprep.subr.mxu0 0.0
    %595 = vmatpush1.msra.mxu0 %v59
    %596 = vmatprep.subr.mxu0 0.0
    %597 = vmatpush1.msra.mxu0 %v60
    %598 = vmatprep.subr.mxu0 0.0
    %599 = vmatpush1.msra.mxu0 %v61
    %600 = vmatprep.subr.mxu0 0.0
    %601 = vmatpush1.msra.mxu0 %v62
    %602 = vmatprep.subr.mxu0 0.0
    %603 = vmatpush1.msra.mxu0 %v63
    %604 = vmatprep.subr.mxu0 0.0
    %605 = vmatpush1.msra.mxu0 %v64
    %606 = vmatprep.subr.mxu0 0.0
    %607 = vmatpush1.msra.mxu0 %v65
    %608 = vmatprep.subr.mxu0 0.0
    %609 = vmatpush1.msra.mxu0 %v66
    %610 = vmatprep.subr.mxu0 0.0
    %611 = vmatpush1.msra.mxu0 %v67
    %612 = vmatprep.subr.mxu0 0.0
    %613 = vmatpush1.msra.mxu0 %v68
    %614 = vmatprep.subr.mxu0 0.0
    %615 = vmatpush1.msra.mxu0 %v69
    %616 = vmatprep.subr.mxu0 0.0
    %617 = vmatpush1.msra.mxu0 %v70
    %618 = vmatprep.subr.mxu0 0.0
    %619 = vmatpush1.msra.mxu0 %v71
    %620 = vmatprep.subr.mxu0 0.0
    %621 = vmatpush1.msra.mxu0 %v72
    %622 = vmatprep.subr.mxu0 0.0
    %623 = vmatpush1.msra.mxu0 %v73
    %624 = vmatprep.subr.mxu0 0.0
    %625 = vmatpush1.msra.mxu0 %v74
    %626 = vmatprep.subr.mxu0 0.0
    %627 = vmatpush1.msra.mxu0 0.0
    %628 = vmatprep.subr.mxu0 0.0
    %629 = vmatpush1.msra.mxu0 0.0
    %630 = vmatprep.subr.mxu0 0.0
    %631 = vmatpush1.msra.mxu0 0.0
    %632 = vmatprep.subr.mxu0 0.0
    %633 = vmatpush1.msra.mxu0 0.0
    %634 = vmatprep.subr.mxu0 0.0
    %635 = vmatpush1.msra.mxu0 0.0
    %636 = vmatprep.subr.mxu0 0.0
    %637 = vmatpush1.msra.mxu0 0.0
    %638 = vmatprep.subr.mxu0 0.0
    %639 = vmatpush1.msra.mxu0 0.0
    %640 = vmatprep.subr.mxu0 0.0
    %641 = vmatpush1.msra.mxu0 0.0
    %642 = vmatprep.subr.mxu0 0.0
    %643 = vmatpush1.msra.mxu0 0.0
    %644 = vmatprep.subr.mxu0 0.0
    %645 = vmatpush1.msra.mxu0 0.0
    %646 = vmatprep.subr.mxu0 0.0
    %647 = vmatpush1.msra.mxu0 0.0
    %648 = vmatprep.subr.mxu0 0.0
    %649 = vmatpush1.msra.mxu0 0.0
    %650 = vmatprep.subr.mxu0 0.0
    %651 = vmatpush1.msra.mxu0 0.0
    %652 = vmatprep.subr.mxu0 0.0
    %653 = vmatpush1.msra.mxu0 0.0
    %654 = vmatprep.subr.mxu0 0.0
    %655 = vmatpush1.msra.mxu0 0.0
    %656 = vmatprep.subr.mxu0 0.0
    %657 = vmatpush1.msra.mxu0 0.0
    %658 = vmatprep.mubr.f32.mxu0 0.0
    %659 = vmatmul.mubr.f32.gmra.mrb[0].mxu0 %v591
    %v660 = vpop.f32.mrb[0].mxu0
    %v661 = vadd.f32 0.0, %v660
    %v662 = vpop.f32.mrb[0].mxu0
    %663 = vdwg.mxu0
    %v664 = vadd.f32 %v593, %v661
    %v665 = vtanh.pop %v664
    %v666 = vld [vmem:[#allocation7] sm:$0xff]
    %v667 = vld [vmem:[#allocation7 + $0x8] sm:$0xff]
    %v668 = vld [vmem:[#allocation7 + $0x10] sm:$0xff]
    %v669 = vld [vmem:[#allocation7 + $0x18] sm:$0xff]
    %v670 = vld [vmem:[#allocation7 + $0x20] sm:$0xff]
    %v671 = vld [vmem:[#allocation7 + $0x28] sm:$0xff]
    %v672 = vld [vmem:[#allocation7 + $0x30] sm:$0xff]
    %v673 = vld [vmem:[#allocation7 + $0x38] sm:$0xff]
    %v674 = vld [vmem:[#allocation7 + $0x40] sm:$0xff]
    %v675 = vld [vmem:[#allocation7 + $0x48] sm:$0xff]
    %v676 = vld [vmem:[#allocation7 + $0x50] sm:$0xff]
    %v677 = vld [vmem:[#allocation7 + $0x58] sm:$0xff]
    %v678 = vld [vmem:[#allocation7 + $0x60] sm:$0xff]
    %v679 = vld [vmem:[#allocation7 + $0x68] sm:$0xff]
    %v680 = vld [vmem:[#allocation7 + $0x70] sm:$0xff]
    %v681 = vld [vmem:[#allocation7 + $0x78] sm:$0xff]
    %v682 = vld [vmem:[%s3] sm:$0x1]
    %v684 = vlaneseq
    %v685 = vshrl.u32 %v684, 7
    %v686 = vsub.s32 0, %v685
    %v687 = vrot.slane %v682, %v686
    %689 = vmatprep.subr.mxu0 0.0
    %690 = vmatpush1.msra.mxu0 %v666
    %691 = vmatprep.subr.mxu0 0.0
    %692 = vmatpush1.msra.mxu0 %v667
    %693 = vmatprep.subr.mxu0 0.0
    %694 = vmatpush1.msra.mxu0 %v668
    %695 = vmatprep.subr.mxu0 0.0
    %696 = vmatpush1.msra.mxu0 %v669
    %697 = vmatprep.subr.mxu0 0.0
    %698 = vmatpush1.msra.mxu0 %v670
    %699 = vmatprep.subr.mxu0 0.0
    %700 = vmatpush1.msra.mxu0 %v671
    %701 = vmatprep.subr.mxu0 0.0
    %702 = vmatpush1.msra.mxu0 %v672
    %703 = vmatprep.subr.mxu0 0.0
    %704 = vmatpush1.msra.mxu0 %v673
    %705 = vmatprep.subr.mxu0 0.0
    %706 = vmatpush1.msra.mxu0 %v674
    %707 = vmatprep.subr.mxu0 0.0
    %708 = vmatpush1.msra.mxu0 %v675
    %709 = vmatprep.subr.mxu0 0.0
    %710 = vmatpush1.msra.mxu0 %v676
    %711 = vmatprep.subr.mxu0 0.0
    %712 = vmatpush1.msra.mxu0 %v677
    %713 = vmatprep.subr.mxu0 0.0
    %714 = vmatpush1.msra.mxu0 %v678
    %715 = vmatprep.subr.mxu0 0.0
    %716 = vmatpush1.msra.mxu0 %v679
    %717 = vmatprep.subr.mxu0 0.0
    %718 = vmatpush1.msra.mxu0 %v680
    %719 = vmatprep.subr.mxu0 0.0
    %720 = vmatpush1.msra.mxu0 %v681
    %721 = vmatprep.subr.mxu0 0.0
    %722 = vmatpush1.msra.mxu0 0.0
    %723 = vmatprep.subr.mxu0 0.0
    %724 = vmatpush1.msra.mxu0 0.0
    %725 = vmatprep.subr.mxu0 0.0
    %726 = vmatpush1.msra.mxu0 0.0
    %727 = vmatprep.subr.mxu0 0.0
    %728 = vmatpush1.msra.mxu0 0.0
    %729 = vmatprep.subr.mxu0 0.0
    %730 = vmatpush1.msra.mxu0 0.0
    %731 = vmatprep.subr.mxu0 0.0
    %732 = vmatpush1.msra.mxu0 0.0
    %733 = vmatprep.subr.mxu0 0.0
    %734 = vmatpush1.msra.mxu0 0.0
    %735 = vmatprep.subr.mxu0 0.0
    %736 = vmatpush1.msra.mxu0 0.0
    %737 = vmatprep.subr.mxu0 0.0
    %738 = vmatpush1.msra.mxu0 0.0
    %739 = vmatprep.subr.mxu0 0.0
    %740 = vmatpush1.msra.mxu0 0.0
    %741 = vmatprep.subr.mxu0 0.0
    %742 = vmatpush1.msra.mxu0 0.0
    %743 = vmatprep.subr.mxu0 0.0
    %744 = vmatpush1.msra.mxu0 0.0
    %745 = vmatprep.subr.mxu0 0.0
    %746 = vmatpush1.msra.mxu0 0.0
    %747 = vmatprep.subr.mxu0 0.0
    %748 = vmatpush1.msra.mxu0 0.0
    %749 = vmatprep.subr.mxu0 0.0
    %750 = vmatpush1.msra.mxu0 0.0
    %751 = vmatprep.subr.mxu0 0.0
    %752 = vmatpush1.msra.mxu0 0.0
    %753 = vmatprep.mubr.f32.mxu0 0.0
    %754 = vmatmul.mubr.f32.gmra.mrb[0].mxu0 %v665
    %v755 = vpop.f32.mrb[0].mxu0
    %v756 = vadd.f32 %v687, %v755
    %v757 = vpop.f32.mrb[0].mxu0
    %758 = vdwg.mxu0
    %759 = vst [vmem:[#allocation8] sm:$0xff] %v756
    // Predicated region
    $region30: #{tpu_custom_call.1} parent=1 // pred_check
      _
    $region31: #{tpu_custom_call.1} parent=1 // pred_check_branch
      %761 = sbr.rel (0) target = $region33
    $region32: #{tpu_custom_call.1} parent=1 // pred_region
      %s763 = ssub.s32 128, 128
      %764 = vsyncadd [#allocation4], %s763
      %s766 = sshll.u32 [#allocation8], 4
      %s767 = int_to_ptr.vmem [resolvable:$true] %s766
      %769 = dma.vmem_to_hbm [thread:$0]  %s767, 128, %s4, [#allocation4]
    $region33: #{tpu_custom_call.1} parent=1 // pred_fallthru
      _
    // Predicated region
    $region34: #{tpu_custom_call.1} parent=1 // pred_check
      _
    $region35: #{tpu_custom_call.1} parent=1 // pred_check_branch
      %771 = sbr.rel (0) target = $region37
    $region36: #{tpu_custom_call.1} parent=1 // pred_region
      %772 = dma.done [#allocation4], 128
    $region37: #{tpu_custom_call.1} parent=1 // pred_fallthru
      _
    %773 = vsyncpa [#allocation3], 1
    %774 = vsyncpa [#allocation6], 1
    %775 = vsyncpa [#allocation4], 1

</llo_original>
